<compile_context>
chip_gen: v7x
topology: tpu7x:2x2x1
jax: 0.10.0
libtpu: 0.0.40
codegen_flags: <defaults>
</compile_context>

<pallas_src>
import functools
import math

import jax
import jax.numpy as jnp
from jax.experimental import pallas as pl
from jax.experimental.pallas import tpu as pltpu


def _highway_kernel(w_ref, b_ref, x_ref, o_ref, *, n_layers, c, compute_dtype):
    # w_ref: (layers, 2C, C) stacked [linear; gate] weights (compute_dtype)
    # b_ref: (layers, 2C, 1) stacked biases (f32)
    # x_ref / o_ref: (C, TL) lane-dense column tile
    x = x_ref[...].astype(jnp.float32)
    for i in range(n_layers):                       # static & small -> unrolled
        pre = jnp.dot(w_ref[i], x.astype(compute_dtype),
                      preferred_element_type=jnp.float32) + b_ref[i]
        h = pre[:c, :]                              # linear branch
        g = jax.nn.sigmoid(pre[c:, :])              # gate branch
        # TODO(synk): training-mode dropout (p=0.1) on `h` is not implemented;
        # eval-mode (identity) semantics are used.
        x = x + g * (h - x)                         # == g*h + (1-g)*x
    o_ref[...] = x.astype(o_ref.dtype)


def _resident_spec(shape):
    """Constant-index BlockSpec: operand stays VMEM-resident across the grid.
    Single-buffered (pl.Buffered(1)) when this JAX exposes pipeline_mode."""
    idx = lambda *_: (0,) * len(shape)
    try:
        return pl.BlockSpec(shape, idx, pipeline_mode=pl.Buffered(1))
    except Exception:  # pragma: no cover - older JAX without pipeline_mode
        return pl.BlockSpec(shape, idx)


def _choose_tile(cols, target, *, other_grid):
    """Lane tile: a multiple of 128 (or == cols when cols < 128), large enough
    to amortize the ~0.35us per-grid-step overhead but capped so the grid keeps
    >= 2 steps (v7x has 2 TensorCores) when the other grid axis is trivial."""
    if cols < 128:
        return cols
    tl = max(128, (min(target, cols) // 128) * 128)
    if other_grid <= 1:
        while tl > 128 and pl.cdiv(cols, tl) < 2:
            tl = max(128, ((tl // 2) // 128) * 128)
    return tl


def _cost_and_params(C, n_layers, cols, tl, x_itemsize, w, b, n_grid_dims):
    cost = pl.CostEstimate(
        flops=n_layers * 2 * (2 * C) * C * cols,
        transcendentals=n_layers * C * cols,
        bytes_accessed=(2 * C * cols * x_itemsize
                        + w.size * w.dtype.itemsize + b.size * 4),
    )
    # VMEM: double-buffered x/out tiles + resident params + f32 kernel temps.
    tile_b = C * tl * x_itemsize
    param_b = w.size * w.dtype.itemsize + b.size * 4
    est = 4 * tile_b + 2 * param_b + 8 * C * tl * 4
    # Only raise the scoped-VMEM limit when the conservative default (16 MiB
    # on v5e) would be tight; cap well under v7x's 64 MiB physical VMEM.
    vmem_limit = min(est + (4 << 20), 56 << 20) if est > (14 << 20) else None
    params = pltpu.CompilerParams(
        dimension_semantics=("parallel",) * n_grid_dims,
        vmem_limit_bytes=vmem_limit,
    )
    return cost, params


def highway_forward(x, wl, bl, wg, bg, *, lane_tile=2048,
                    compute_dtype=jnp.bfloat16):
    """QANet Highway forward (eval mode).

    x       : (N, C, L)
    wl, wg  : (layers, C, C)  1x1 conv weights (kernel dim squeezed), out x in
    bl, bg  : (layers, C)     conv biases
    compute_dtype : matmul-input dtype (bf16 = fast MXU path on all TPU gens;
                    accumulation, sigmoid and gating stay in f32).
    """
    N, C, L = x.shape
    n_layers = wl.shape[0]
    assert wl.shape == (n_layers, C, C) and wg.shape == (n_layers, C, C)
    assert bl.shape == (n_layers, C) and bg.shape == (n_layers, C)

    # Stack [linear; gate] so each layer is a single (2C, C) @ (C, TL) matmul.
    w = jnp.concatenate([wl, wg], axis=1).astype(compute_dtype)          # (layers, 2C, C)
    b = jnp.concatenate([bl, bg], axis=1)[..., None].astype(jnp.float32)  # (layers, 2C, 1)

    kernel = functools.partial(_highway_kernel, n_layers=n_layers, c=C,
                               compute_dtype=compute_dtype)
    w_spec = _resident_spec((n_layers, 2 * C, C))
    b_spec = _resident_spec((n_layers, 2 * C, 1))
    cols = N * L

    if L >= 128:
        # Native (N, C, L) tiling: no transposes, no padding copies.
        tl = _choose_tile(L, lane_tile, other_grid=N)
        grid = (N, pl.cdiv(L, tl))
        cost, cparams = _cost_and_params(C, n_layers, cols, tl,
                                         x.dtype.itemsize, w, b, len(grid))
        xo_spec = pl.BlockSpec((None, C, tl), lambda n, j: (n, 0, j))
        return pl.pallas_call(
            kernel,
            out_shape=jax.ShapeDtypeStruct((N, C, L), x.dtype),
            grid=grid,
            in_specs=[w_spec, b_spec, xo_spec],
            out_specs=pl.BlockSpec((None, C, tl), lambda n, j: (n, 0, j)),
            compiler_params=cparams,
            cost_estimate=cost,
        )(w, b, x)

    # Tiny-L fallback: fold batch into the lane axis so tiles stay lane-dense.
    # (The extra transpose is only taken for small inputs.)
    x2 = jnp.transpose(x, (1, 0, 2)).reshape(C, cols)
    tl = _choose_tile(cols, lane_tile, other_grid=1)
    grid = (pl.cdiv(cols, tl),)
    cost, cparams = _cost_and_params(C, n_layers, cols, tl,
                                     x.dtype.itemsize, w, b, len(grid))
    xo_spec = pl.BlockSpec((C, tl), lambda j: (0, j))
    out2 = pl.pallas_call(
        kernel,
        out_shape=jax.ShapeDtypeStruct((C, cols), x.dtype),
        grid=grid,
        in_specs=[w_spec, b_spec, xo_spec],
        out_specs=pl.BlockSpec((C, tl), lambda j: (0, j)),
        compiler_params=cparams,
        cost_estimate=cost,
    )(w, b, x2)
    return jnp.transpose(out2.reshape(C, N, L), (1, 0, 2))


def init_highway_params(key, layer_num, size):
    """Matches the PyTorch module init: xavier_uniform_ weights (relu=False),
    nn.Conv1d default uniform bias init."""
    kw_l, kb_l, kw_g, kb_g = jax.random.split(key, 4)
    wb = math.sqrt(6.0 / (size + size))   # xavier_uniform_, kernel_size=1
    bb = 1.0 / math.sqrt(size)            # Conv1d default bias bound
    wl = jax.random.uniform(kw_l, (layer_num, size, size), jnp.float32, -wb, wb)
    wg = jax.random.uniform(kw_g, (layer_num, size, size), jnp.float32, -wb, wb)
    bl = jax.random.uniform(kb_l, (layer_num, size), jnp.float32, -bb, bb)
    bg = jax.random.uniform(kb_g, (layer_num, size), jnp.float32, -bb, bb)
    return wl, bl, wg, bg


def highway_ref(x, wl, bl, wg, bg):
    """Pure-JAX reference (eval mode, dropout = identity)."""
    hp = jax.lax.Precision.HIGHEST
    for i in range(wl.shape[0]):
        g = jax.nn.sigmoid(
            jnp.einsum("oc,ncl->nol", wg[i], x, precision=hp) + bg[i][None, :, None])
        h = jnp.einsum("oc,ncl->nol", wl[i], x, precision=hp) + bl[i][None, :, None]
        x = g * h + (1.0 - g) * x
    return x


if __name__ == "__main__":
    key = jax.random.PRNGKey(0)
    k_x, k_p = jax.random.split(key)

    batch, size, layer_num = 2, 96, 2   # size=96 is the module default
    wl, bl, wg, bg = init_highway_params(k_p, layer_num, size)

    # --- Path 1: tiny L (batch folded into lanes), f32 matmul path ----------
    x_small = jax.random.normal(k_x, (batch, size, 16), dtype=jnp.float32)
    out_small = jax.block_until_ready(
        highway_forward(x_small, wl, bl, wg, bg, compute_dtype=jnp.float32))
    ref_small = highway_ref(x_small, wl, bl, wg, bg)
    assert out_small.shape == x_small.shape
    err_small = float(jnp.max(jnp.abs(out_small - ref_small)))
    # Tolerance covers MXU f32 pass behavior vs the HIGHEST-precision reference.
    assert err_small < 2e-2, err_small

    # --- Path 2: L >= 128 (native (N, C, L) tiling), default bf16 matmuls ---
    x_big = jax.random.normal(k_x, (batch, size, 256), dtype=jnp.float32)
    out_big = jax.block_until_ready(highway_forward(x_big, wl, bl, wg, bg))
    ref_big = highway_ref(x_big, wl, bl, wg, bg)
    assert out_big.shape == x_big.shape
    err_big = float(jnp.max(jnp.abs(out_big - ref_big)))
    # bf16 matmul inputs vs f32 reference -> loose tolerance.
    assert err_big < 1e-1, err_big

    print("KERNEL_OK")
</pallas_src>

<mosaic_0001>
module attributes {stable_mosaic.version = 11 : i64} {
  func.func @_highway_kernel(%arg0: i32, %arg1: memref<2x192x96xf32, #tpu.memory_space<vmem>>, %arg2: memref<2x192x1xf32, #tpu.memory_space<vmem>>, %arg3: memref<96x32xf32, #tpu.memory_space<vmem>>, %arg4: memref<96x32xf32, #tpu.memory_space<vmem>>) attributes {dimension_semantics = [#tpu.dimension_semantics<parallel>], iteration_bounds = array<i64: 1>, scalar_prefetch = 0 : i64, scratch_operands = 0 : i64, tpu.core_type = #tpu.core_type<tc>, window_params = [{pipeline_mode = #tpu.pipeline_mode<synchronous>, transform_indices = @transform_0, window_bounds = array<i64: 2, 192, 96>}, {pipeline_mode = #tpu.pipeline_mode<synchronous>, transform_indices = @transform_1, window_bounds = array<i64: 2, 192, 1>}, {transform_indices = @transform_2, window_bounds = array<i64: 96, 32>}, {transform_indices = @transform_3, window_bounds = array<i64: 96, 32>}]} {
    %c0 = arith.constant 0 : index
    %c0_0 = arith.constant 0 : index
    %0 = vector.load %arg3[%c0, %c0_0] : memref<96x32xf32, #tpu.memory_space<vmem>>, vector<96x32xf32>
    %c0_1 = arith.constant 0 : index
    %c0_2 = arith.constant 0 : index
    %c0_3 = arith.constant 0 : index
    %1 = vector.load %arg1[%c0_1, %c0_2, %c0_3] : memref<2x192x96xf32, #tpu.memory_space<vmem>>, vector<1x192x96xf32>
    %2 = vector.shape_cast %1 : vector<1x192x96xf32> to vector<192x96xf32>
    %cst = arith.constant dense<0.000000e+00> : vector<192x32xf32>
    %3 = tpu.matmul %2, %0, %cst {dimension_numbers = #tpu.dot_dimension_numbers<[1], [0], [0], [1], [0, 0, 1, 1], [], []>} : vector<192x96xf32>, vector<96x32xf32>, vector<192x32xf32> -> vector<192x32xf32>
    %c0_4 = arith.constant 0 : index
    %c0_5 = arith.constant 0 : index
    %c0_6 = arith.constant 0 : index
    %4 = vector.load %arg2[%c0_4, %c0_5, %c0_6] : memref<2x192x1xf32, #tpu.memory_space<vmem>>, vector<1x192x1xf32>
    %5 = vector.shape_cast %4 : vector<1x192x1xf32> to vector<192x1xf32>
    %6 = vector.broadcast %5 : vector<192x1xf32> to vector<192x32xf32>
    %7 = arith.addf %3, %6 : vector<192x32xf32>
    %8 = vector.extract_strided_slice %7 {offsets = [0, 0], sizes = [96, 32], strides = [1, 1]} : vector<192x32xf32> to vector<96x32xf32>
    %9 = vector.extract_strided_slice %7 {offsets = [96, 0], sizes = [96, 32], strides = [1, 1]} : vector<192x32xf32> to vector<96x32xf32>
    %10 = arith.negf %9 : vector<96x32xf32>
    %11 = math.exp %10 : vector<96x32xf32>
    %cst_7 = arith.constant 1.000000e+00 : f32
    %12 = vector.broadcast %cst_7 : f32 to vector<96x32xf32>
    %13 = arith.addf %12, %11 : vector<96x32xf32>
    %14 = arith.divf %12, %13 : vector<96x32xf32>
    %15 = arith.subf %8, %0 : vector<96x32xf32>
    %16 = arith.mulf %14, %15 : vector<96x32xf32>
    %17 = arith.addf %0, %16 : vector<96x32xf32>
    %c1 = arith.constant 1 : index
    %c0_8 = arith.constant 0 : index
    %c0_9 = arith.constant 0 : index
    %18 = vector.load %arg1[%c1, %c0_8, %c0_9] : memref<2x192x96xf32, #tpu.memory_space<vmem>>, vector<1x192x96xf32>
    %19 = vector.shape_cast %18 : vector<1x192x96xf32> to vector<192x96xf32>
    %cst_10 = arith.constant dense<0.000000e+00> : vector<192x32xf32>
    %20 = tpu.matmul %19, %17, %cst_10 {dimension_numbers = #tpu.dot_dimension_numbers<[1], [0], [0], [1], [0, 0, 1, 1], [], []>} : vector<192x96xf32>, vector<96x32xf32>, vector<192x32xf32> -> vector<192x32xf32>
    %c1_11 = arith.constant 1 : index
    %c0_12 = arith.constant 0 : index
    %c0_13 = arith.constant 0 : index
    %21 = vector.load %arg2[%c1_11, %c0_12, %c0_13] : memref<2x192x1xf32, #tpu.memory_space<vmem>>, vector<1x192x1xf32>
    %22 = vector.shape_cast %21 : vector<1x192x1xf32> to vector<192x1xf32>
    %23 = vector.broadcast %22 : vector<192x1xf32> to vector<192x32xf32>
    %24 = arith.addf %20, %23 : vector<192x32xf32>
    %25 = vector.extract_strided_slice %24 {offsets = [0, 0], sizes = [96, 32], strides = [1, 1]} : vector<192x32xf32> to vector<96x32xf32>
    %26 = vector.extract_strided_slice %24 {offsets = [96, 0], sizes = [96, 32], strides = [1, 1]} : vector<192x32xf32> to vector<96x32xf32>
    %27 = arith.negf %26 : vector<96x32xf32>
    %28 = math.exp %27 : vector<96x32xf32>
    %cst_14 = arith.constant 1.000000e+00 : f32
    %29 = vector.broadcast %cst_14 : f32 to vector<96x32xf32>
    %30 = arith.addf %29, %28 : vector<96x32xf32>
    %31 = arith.divf %29, %30 : vector<96x32xf32>
    %32 = arith.subf %25, %17 : vector<96x32xf32>
    %33 = arith.mulf %31, %32 : vector<96x32xf32>
    %34 = arith.addf %17, %33 : vector<96x32xf32>
    %c0_15 = arith.constant 0 : index
    %c0_16 = arith.constant 0 : index
    %35 = vector.load %arg4[%c0_15, %c0_16] : memref<96x32xf32, #tpu.memory_space<vmem>>, vector<96x32xf32>
    tpu.vector_store %arg4[%c0_15, %c0_16], %34 {strides = array<i32>} : memref<96x32xf32, #tpu.memory_space<vmem>>, vector<96x32xf32>,
    return
  }
  func.func @transform_0(%arg0: i32) -> (i32, i32, i32) {
    %c0_i32 = arith.constant 0 : i32
    %c0_i32_0 = arith.constant 0 : i32
    %c0_i32_1 = arith.constant 0 : i32
    %c0_i32_2 = arith.constant 0 : i32
    return %c0_i32, %c0_i32_0, %c0_i32_1 : i32, i32, i32
  }
  func.func @transform_1(%arg0: i32) -> (i32, i32, i32) {
    %c0_i32 = arith.constant 0 : i32
    %c0_i32_0 = arith.constant 0 : i32
    %c0_i32_1 = arith.constant 0 : i32
    %c0_i32_2 = arith.constant 0 : i32
    return %c0_i32, %c0_i32_0, %c0_i32_1 : i32, i32, i32
  }
  func.func @transform_2(%arg0: i32) -> (i32, i32) {
    %c0_i32 = arith.constant 0 : i32
    %c0_i32_0 = arith.constant 0 : i32
    return %c0_i32, %arg0 : i32, i32
  }
  func.func @transform_3(%arg0: i32) -> (i32, i32) {
    %c0_i32 = arith.constant 0 : i32
    %c0_i32_0 = arith.constant 0 : i32
    return %c0_i32, %arg0 : i32, i32
  }
}

</mosaic_0001>

<llo_original>
// kernel: tpu_custom_call.1
$region0: #{tpu_custom_call.1}
  #allocation0 [shape = 'u32[]', space=smem, size = 0x4, offset = 0x4, fixed_abs, tag = 'smem constant byte address 0x4 - core index']
  #allocation1 [shape = 'u32[144,128]{1,0:T(1,128)}', space=vmem, size = 0x12000, scoped, tag = 'internal scratch']
  %s0 = inlined_call_operand.vmem [shape: f32[2,192,96], index: 0, kind: input, shape index: {}]
  %s1 = inlined_call_operand.vmem [shape: f32[2,192,1], index: 1, kind: input, shape index: {}]
  %s2 = inlined_call_operand.vmem [shape: f32[96,32], index: 2, kind: input, shape index: {}]
  %s3 = inlined_call_operand.vmem [shape: f32[96,32], index: 3, kind: output, shape index: {}]
  %s4 = sld [smem:[#allocation0]]
  $region22: #{tpu_custom_call.1} parent=0
    _
  %s6 = ssub.s32 1, %s4
  %s7 = scalar_select 0, %s6, %s4
  // Predicated region
  $region2: #{tpu_custom_call.1} parent=0 // pred_check
    _
  $region3: #{tpu_custom_call.1} parent=0 // pred_check_branch
    %9 = sbr.rel (0) target = $region5
  $region4: #{tpu_custom_call.1} parent=0 // pred_region
    _
  $region5: #{tpu_custom_call.1} parent=0 // pred_fallthru
    _
  // Predicated region
  $region6: #{tpu_custom_call.1} parent=0 // pred_check
    _
  $region7: #{tpu_custom_call.1} parent=0 // pred_check_branch
    %11 = sbr.rel (0) target = $region9
  $region8: #{tpu_custom_call.1} parent=0 // pred_region
    _
  $region9: #{tpu_custom_call.1} parent=0 // pred_fallthru
    _
  // Predicated region
  $region10: #{tpu_custom_call.1} parent=0 // pred_check
    _
  $region11: #{tpu_custom_call.1} parent=0 // pred_check_branch
    %13 = sbr.rel (0) target = $region13
  $region12: #{tpu_custom_call.1} parent=0 // pred_region
    _
  $region13: #{tpu_custom_call.1} parent=0 // pred_fallthru
    _
  %v14 = vld [vmem:[%s2] sm:$0xff]
  %v15 = vld [vmem:[%s2 + $0x8] sm:$0xff]
  %v16 = vld [vmem:[%s2 + $0x10] sm:$0xff]
  %v17 = vld [vmem:[%s2 + $0x18] sm:$0xff]
  %v18 = vld [vmem:[%s2 + $0x20] sm:$0xff]
  %v19 = vld [vmem:[%s2 + $0x28] sm:$0xff]
  %v20 = vld [vmem:[%s2 + $0x30] sm:$0xff]
  %v21 = vld [vmem:[%s2 + $0x38] sm:$0xff]
  %v22 = vld [vmem:[%s2 + $0x40] sm:$0xff]
  %v23 = vld [vmem:[%s2 + $0x48] sm:$0xff]
  %v24 = vld [vmem:[%s2 + $0x50] sm:$0xff]
  %v25 = vld [vmem:[%s2 + $0x58] sm:$0xff]
  %v26 = vld [vmem:[%s0] sm:$0xff]
  %v27 = vld [vmem:[%s0 + $0x8] sm:$0xff]
  %v28 = vld [vmem:[%s0 + $0x10] sm:$0xff]
  %v29 = vld [vmem:[%s0 + $0x18] sm:$0xff]
  %v30 = vld [vmem:[%s0 + $0x20] sm:$0xff]
  %v31 = vld [vmem:[%s0 + $0x28] sm:$0xff]
  %v32 = vld [vmem:[%s0 + $0x30] sm:$0xff]
  %v33 = vld [vmem:[%s0 + $0x38] sm:$0xff]
  %v34 = vld [vmem:[%s0 + $0x40] sm:$0xff]
  %v35 = vld [vmem:[%s0 + $0x48] sm:$0xff]
  %v36 = vld [vmem:[%s0 + $0x50] sm:$0xff]
  %v37 = vld [vmem:[%s0 + $0x58] sm:$0xff]
  %v38 = vld [vmem:[%s0 + $0x60] sm:$0xff]
  %v39 = vld [vmem:[%s0 + $0x68] sm:$0xff]
  %v40 = vld [vmem:[%s0 + $0x70] sm:$0xff]
  %v41 = vld [vmem:[%s0 + $0x78] sm:$0xff]
  %v42 = vld [vmem:[%s0 + $0x80] sm:$0xff]
  %v43 = vld [vmem:[%s0 + $0x88] sm:$0xff]
  %v44 = vld [vmem:[%s0 + $0x90] sm:$0xff]
  %v45 = vld [vmem:[%s0 + $0x98] sm:$0xff]
  %v46 = vld [vmem:[%s0 + $0xa0] sm:$0xff]
  %v47 = vld [vmem:[%s0 + $0xa8] sm:$0xff]
  %v48 = vld [vmem:[%s0 + $0xb0] sm:$0xff]
  %v49 = vld [vmem:[%s0 + $0xb8] sm:$0xff]
  %v50 = vld [vmem:[%s1] sm:$0xff]
  %v51 = vld [vmem:[%s1 + $0x8] sm:$0xff]
  %v52 = vld [vmem:[%s1 + $0x10] sm:$0xff]
  %v53 = vld [vmem:[%s1 + $0x18] sm:$0xff]
  %v54 = vld [vmem:[%s1 + $0x20] sm:$0xff]
  %v55 = vld [vmem:[%s1 + $0x28] sm:$0xff]
  %v56 = vld [vmem:[%s1 + $0x30] sm:$0xff]
  %v57 = vld [vmem:[%s1 + $0x38] sm:$0xff]
  %v58 = vld [vmem:[%s1 + $0x40] sm:$0xff]
  %v59 = vld [vmem:[%s1 + $0x48] sm:$0xff]
  %v60 = vld [vmem:[%s1 + $0x50] sm:$0xff]
  %v61 = vld [vmem:[%s1 + $0x58] sm:$0xff]
  %v62 = vld [vmem:[%s1 + $0x60] sm:$0xff]
  %v63 = vld [vmem:[%s1 + $0x68] sm:$0xff]
  %v64 = vld [vmem:[%s1 + $0x70] sm:$0xff]
  %v65 = vld [vmem:[%s1 + $0x78] sm:$0xff]
  %v66 = vld [vmem:[%s1 + $0x80] sm:$0xff]
  %v67 = vld [vmem:[%s1 + $0x88] sm:$0xff]
  %v68 = vld [vmem:[%s1 + $0x90] sm:$0xff]
  %v69 = vld [vmem:[%s1 + $0x98] sm:$0xff]
  %v70 = vld [vmem:[%s1 + $0xa0] sm:$0xff]
  %v71 = vld [vmem:[%s1 + $0xa8] sm:$0xff]
  %v72 = vld [vmem:[%s1 + $0xb0] sm:$0xff]
  %v73 = vld [vmem:[%s1 + $0xb8] sm:$0xff]
  %75 = vset.pattern.permute.xlu0 0
  %76 = vperm.xlu0 %75, %v50
  %v77 = vpop.permute.xlu0 %76
  %80 = vset.pattern.permute.xlu0 0
  %81 = vperm.xlu0 %80, %v51
  %v82 = vpop.permute.xlu0 %81
  %85 = vset.pattern.permute.xlu0 0
  %86 = vperm.xlu0 %85, %v52
  %v87 = vpop.permute.xlu0 %86
  %90 = vset.pattern.permute.xlu0 0
  %91 = vperm.xlu0 %90, %v53
  %v92 = vpop.permute.xlu0 %91
  %95 = vset.pattern.permute.xlu0 0
  %96 = vperm.xlu0 %95, %v54
  %v97 = vpop.permute.xlu0 %96
  %100 = vset.pattern.permute.xlu0 0
  %101 = vperm.xlu0 %100, %v55
  %v102 = vpop.permute.xlu0 %101
  %105 = vset.pattern.permute.xlu0 0
  %106 = vperm.xlu0 %105, %v56
  %v107 = vpop.permute.xlu0 %106
  %110 = vset.pattern.permute.xlu0 0
  %111 = vperm.xlu0 %110, %v57
  %v112 = vpop.permute.xlu0 %111
  %115 = vset.pattern.permute.xlu0 0
  %116 = vperm.xlu0 %115, %v58
  %v117 = vpop.permute.xlu0 %116
  %120 = vset.pattern.permute.xlu0 0
  %121 = vperm.xlu0 %120, %v59
  %v122 = vpop.permute.xlu0 %121
  %125 = vset.pattern.permute.xlu0 0
  %126 = vperm.xlu0 %125, %v60
  %v127 = vpop.permute.xlu0 %126
  %130 = vset.pattern.permute.xlu0 0
  %131 = vperm.xlu0 %130, %v61
  %v132 = vpop.permute.xlu0 %131
  %135 = vset.pattern.permute.xlu0 0
  %136 = vperm.xlu0 %135, %v62
  %v137 = vpop.permute.xlu0 %136
  %140 = vset.pattern.permute.xlu0 0
  %141 = vperm.xlu0 %140, %v63
  %v142 = vpop.permute.xlu0 %141
  %145 = vset.pattern.permute.xlu0 0
  %146 = vperm.xlu0 %145, %v64
  %v147 = vpop.permute.xlu0 %146
  %150 = vset.pattern.permute.xlu0 0
  %151 = vperm.xlu0 %150, %v65
  %v152 = vpop.permute.xlu0 %151
  %155 = vset.pattern.permute.xlu0 0
  %156 = vperm.xlu0 %155, %v66
  %v157 = vpop.permute.xlu0 %156
  %160 = vset.pattern.permute.xlu0 0
  %161 = vperm.xlu0 %160, %v67
  %v162 = vpop.permute.xlu0 %161
  %165 = vset.pattern.permute.xlu0 0
  %166 = vperm.xlu0 %165, %v68
  %v167 = vpop.permute.xlu0 %166
  %170 = vset.pattern.permute.xlu0 0
  %171 = vperm.xlu0 %170, %v69
  %v172 = vpop.permute.xlu0 %171
  %175 = vset.pattern.permute.xlu0 0
  %176 = vperm.xlu0 %175, %v70
  %v177 = vpop.permute.xlu0 %176
  %180 = vset.pattern.permute.xlu0 0
  %181 = vperm.xlu0 %180, %v71
  %v182 = vpop.permute.xlu0 %181
  %185 = vset.pattern.permute.xlu0 0
  %186 = vperm.xlu0 %185, %v72
  %v187 = vpop.permute.xlu0 %186
  %190 = vset.pattern.permute.xlu0 0
  %191 = vperm.xlu0 %190, %v73
  %v192 = vpop.permute.xlu0 %191
  %vm194 = vcmask 785408
  %v196 = vsel %vm194, %v26, 0
  %v199 = vsel %vm194, %v27, 0
  %v202 = vsel %vm194, %v28, 0
  %v205 = vsel %vm194, %v29, 0
  %v208 = vsel %vm194, %v30, 0
  %v211 = vsel %vm194, %v31, 0
  %v214 = vsel %vm194, %v32, 0
  %v217 = vsel %vm194, %v33, 0
  %v220 = vsel %vm194, %v34, 0
  %v223 = vsel %vm194, %v35, 0
  %v226 = vsel %vm194, %v36, 0
  %v229 = vsel %vm194, %v37, 0
  %v232 = vsel %vm194, %v38, 0
  %v235 = vsel %vm194, %v39, 0
  %v238 = vsel %vm194, %v40, 0
  %v241 = vsel %vm194, %v41, 0
  %v244 = vsel %vm194, %v42, 0
  %v247 = vsel %vm194, %v43, 0
  %v250 = vsel %vm194, %v44, 0
  %v253 = vsel %vm194, %v45, 0
  %v256 = vsel %vm194, %v46, 0
  %v259 = vsel %vm194, %v47, 0
  %v262 = vsel %vm194, %v48, 0
  %v265 = vsel %vm194, %v49, 0
  %267 = vmatprep.subr.mxu0 0.0
  %268 = vmatpush1.msra.mxu0 %v14
  %269 = vmatprep.subr.mxu0 0.0
  %270 = vmatpush1.msra.mxu0 %v15
  %271 = vmatprep.subr.mxu0 0.0
  %272 = vmatpush1.msra.mxu0 %v16
  %273 = vmatprep.subr.mxu0 0.0
  %274 = vmatpush1.msra.mxu0 %v17
  %275 = vmatprep.subr.mxu0 0.0
  %276 = vmatpush1.msra.mxu0 %v18
  %277 = vmatprep.subr.mxu0 0.0
  %278 = vmatpush1.msra.mxu0 %v19
  %279 = vmatprep.subr.mxu0 0.0
  %280 = vmatpush1.msra.mxu0 %v20
  %281 = vmatprep.subr.mxu0 0.0
  %282 = vmatpush1.msra.mxu0 %v21
  %283 = vmatprep.subr.mxu0 0.0
  %284 = vmatpush1.msra.mxu0 %v22
  %285 = vmatprep.subr.mxu0 0.0
  %286 = vmatpush1.msra.mxu0 %v23
  %287 = vmatprep.subr.mxu0 0.0
  %288 = vmatpush1.msra.mxu0 %v24
  %289 = vmatprep.subr.mxu0 0.0
  %290 = vmatpush1.msra.mxu0 %v25
  %291 = vmatprep.subr.mxu0 0.0
  %292 = vmatpush1.msra.mxu0 0.0
  %293 = vmatprep.subr.mxu0 0.0
  %294 = vmatpush1.msra.mxu0 0.0
  %295 = vmatprep.subr.mxu0 0.0
  %296 = vmatpush1.msra.mxu0 0.0
  %297 = vmatprep.subr.mxu0 0.0
  %298 = vmatpush1.msra.mxu0 0.0
  %299 = vmatprep.subr.mxu0 0.0
  %300 = vmatpush1.msra.mxu0 0.0
  %301 = vmatprep.subr.mxu0 0.0
  %302 = vmatpush1.msra.mxu0 0.0
  %303 = vmatprep.subr.mxu0 0.0
  %304 = vmatpush1.msra.mxu0 0.0
  %305 = vmatprep.subr.mxu0 0.0
  %306 = vmatpush1.msra.mxu0 0.0
  %307 = vmatprep.subr.mxu0 0.0
  %308 = vmatpush1.msra.mxu0 0.0
  %309 = vmatprep.subr.mxu0 0.0
  %310 = vmatpush1.msra.mxu0 0.0
  %311 = vmatprep.subr.mxu0 0.0
  %312 = vmatpush1.msra.mxu0 0.0
  %313 = vmatprep.subr.mxu0 0.0
  %314 = vmatpush1.msra.mxu0 0.0
  %315 = vmatprep.subr.mxu0 0.0
  %316 = vmatpush1.msra.mxu0 0.0
  %317 = vmatprep.subr.mxu0 0.0
  %318 = vmatpush1.msra.mxu0 0.0
  %319 = vmatprep.subr.mxu0 0.0
  %320 = vmatpush1.msra.mxu0 0.0
  %321 = vmatprep.subr.mxu0 0.0
  %322 = vmatpush1.msra.mxu0 0.0
  %323 = vmatprep.subr.mxu0 0.0
  %324 = vmatpush1.msra.mxu0 0.0
  %325 = vmatprep.subr.mxu0 0.0
  %326 = vmatpush1.msra.mxu0 0.0
  %327 = vmatprep.subr.mxu0 0.0
  %328 = vmatpush1.msra.mxu0 0.0
  %329 = vmatprep.subr.mxu0 0.0
  %330 = vmatpush1.msra.mxu0 0.0
  %331 = vmatprep.mubr.f32.mxu0 0.0
  %332 = vmatmul.mubr.f32.gmra.mrb[0].mxu0 %v196
  %v333 = vpop.f32.mrb[0].mxu0
  %v334 = vadd.f32 %v77, %v333
  %v335 = vpop.f32.mrb[0].mxu0
  %336 = vmatprep.mubr.f32.mxu0 0.0
  %337 = vmatmul.mubr.f32.gmra.mrb[0].mxu0 %v199
  %v338 = vpop.f32.mrb[0].mxu0
  %v339 = vadd.f32 %v82, %v338
  %v340 = vpop.f32.mrb[0].mxu0
  %341 = vmatprep.mubr.f32.mxu0 0.0
  %342 = vmatmul.mubr.f32.gmra.mrb[0].mxu0 %v202
  %v343 = vpop.f32.mrb[0].mxu0
  %v344 = vadd.f32 %v87, %v343
  %v345 = vpop.f32.mrb[0].mxu0
  %346 = vmatprep.mubr.f32.mxu0 0.0
  %347 = vmatmul.mubr.f32.gmra.mrb[0].mxu0 %v205
  %v348 = vpop.f32.mrb[0].mxu0
  %v349 = vadd.f32 %v92, %v348
  %v350 = vpop.f32.mrb[0].mxu0
  %351 = vmatprep.mubr.f32.mxu0 0.0
  %352 = vmatmul.mubr.f32.gmra.mrb[0].mxu0 %v208
  %v353 = vpop.f32.mrb[0].mxu0
  %v354 = vadd.f32 %v97, %v353
  %v355 = vpop.f32.mrb[0].mxu0
  %356 = vmatprep.mubr.f32.mxu0 0.0
  %357 = vmatmul.mubr.f32.gmra.mrb[0].mxu0 %v211
  %v358 = vpop.f32.mrb[0].mxu0
  %v359 = vadd.f32 %v102, %v358
  %v360 = vpop.f32.mrb[0].mxu0
  %361 = vmatprep.mubr.f32.mxu0 0.0
  %362 = vmatmul.mubr.f32.gmra.mrb[0].mxu0 %v214
  %v363 = vpop.f32.mrb[0].mxu0
  %v364 = vadd.f32 %v107, %v363
  %v365 = vpop.f32.mrb[0].mxu0
  %366 = vmatprep.mubr.f32.mxu0 0.0
  %367 = vmatmul.mubr.f32.gmra.mrb[0].mxu0 %v217
  %v368 = vpop.f32.mrb[0].mxu0
  %v369 = vadd.f32 %v112, %v368
  %v370 = vpop.f32.mrb[0].mxu0
  %371 = vmatprep.mubr.f32.mxu0 0.0
  %372 = vmatmul.mubr.f32.gmra.mrb[0].mxu0 %v220
  %v373 = vpop.f32.mrb[0].mxu0
  %v374 = vadd.f32 %v117, %v373
  %v375 = vpop.f32.mrb[0].mxu0
  %376 = vmatprep.mubr.f32.mxu0 0.0
  %377 = vmatmul.mubr.f32.gmra.mrb[0].mxu0 %v223
  %v378 = vpop.f32.mrb[0].mxu0
  %v379 = vadd.f32 %v122, %v378
  %v380 = vpop.f32.mrb[0].mxu0
  %381 = vmatprep.mubr.f32.mxu0 0.0
  %382 = vmatmul.mubr.f32.gmra.mrb[0].mxu0 %v226
  %v383 = vpop.f32.mrb[0].mxu0
  %v384 = vadd.f32 %v127, %v383
  %v385 = vpop.f32.mrb[0].mxu0
  %386 = vmatprep.mubr.f32.mxu0 0.0
  %387 = vmatmul.mubr.f32.gmra.mrb[0].mxu0 %v229
  %v388 = vpop.f32.mrb[0].mxu0
  %v389 = vadd.f32 %v132, %v388
  %v390 = vpop.f32.mrb[0].mxu0
  %391 = vmatprep.mubr.f32.mxu0 0.0
  %392 = vmatmul.mubr.f32.gmra.mrb[0].mxu0 %v232
  %v393 = vpop.f32.mrb[0].mxu0
  %v394 = vadd.f32 %v137, %v393
  %v395 = vpop.f32.mrb[0].mxu0
  %396 = vmatprep.mubr.f32.mxu0 0.0
  %397 = vmatmul.mubr.f32.gmra.mrb[0].mxu0 %v235
  %v398 = vpop.f32.mrb[0].mxu0
  %v399 = vadd.f32 %v142, %v398
  %v400 = vpop.f32.mrb[0].mxu0
  %401 = vmatprep.mubr.f32.mxu0 0.0
  %402 = vmatmul.mubr.f32.gmra.mrb[0].mxu0 %v238
  %v403 = vpop.f32.mrb[0].mxu0
  %v404 = vadd.f32 %v147, %v403
  %v405 = vpop.f32.mrb[0].mxu0
  %406 = vmatprep.mubr.f32.mxu0 0.0
  %407 = vmatmul.mubr.f32.gmra.mrb[0].mxu0 %v241
  %v408 = vpop.f32.mrb[0].mxu0
  %v409 = vadd.f32 %v152, %v408
  %v410 = vpop.f32.mrb[0].mxu0
  %411 = vmatprep.mubr.f32.mxu0 0.0
  %412 = vmatmul.mubr.f32.gmra.mrb[0].mxu0 %v244
  %v413 = vpop.f32.mrb[0].mxu0
  %v414 = vadd.f32 %v157, %v413
  %v415 = vpop.f32.mrb[0].mxu0
  %416 = vmatprep.mubr.f32.mxu0 0.0
  %417 = vmatmul.mubr.f32.gmra.mrb[0].mxu0 %v247
  %v418 = vpop.f32.mrb[0].mxu0
  %v419 = vadd.f32 %v162, %v418
  %v420 = vpop.f32.mrb[0].mxu0
  %421 = vmatprep.mubr.f32.mxu0 0.0
  %422 = vmatmul.mubr.f32.gmra.mrb[0].mxu0 %v250
  %v423 = vpop.f32.mrb[0].mxu0
  %v424 = vadd.f32 %v167, %v423
  %v425 = vpop.f32.mrb[0].mxu0
  %426 = vmatprep.mubr.f32.mxu0 0.0
  %427 = vmatmul.mubr.f32.gmra.mrb[0].mxu0 %v253
  %v428 = vpop.f32.mrb[0].mxu0
  %v429 = vadd.f32 %v172, %v428
  %v430 = vpop.f32.mrb[0].mxu0
  %431 = vmatprep.mubr.f32.mxu0 0.0
  %432 = vmatmul.mubr.f32.gmra.mrb[0].mxu0 %v256
  %v433 = vpop.f32.mrb[0].mxu0
  %v434 = vadd.f32 %v177, %v433
  %v435 = vpop.f32.mrb[0].mxu0
  %436 = vmatprep.mubr.f32.mxu0 0.0
  %437 = vmatmul.mubr.f32.gmra.mrb[0].mxu0 %v259
  %v438 = vpop.f32.mrb[0].mxu0
  %v439 = vadd.f32 %v182, %v438
  %v440 = vpop.f32.mrb[0].mxu0
  %441 = vmatprep.mubr.f32.mxu0 0.0
  %442 = vmatmul.mubr.f32.gmra.mrb[0].mxu0 %v262
  %v443 = vpop.f32.mrb[0].mxu0
  %v444 = vadd.f32 %v187, %v443
  %v445 = vpop.f32.mrb[0].mxu0
  %446 = vmatprep.mubr.f32.mxu0 0.0
  %447 = vmatmul.mubr.f32.gmra.mrb[0].mxu0 %v265
  %v448 = vpop.f32.mrb[0].mxu0
  %v449 = vadd.f32 %v192, %v448
  %v450 = vpop.f32.mrb[0].mxu0
  %451 = vdwg.mxu0
  %v452 = vxor.u32 %v394, 2147483648
  %v453 = vxor.u32 %v399, 2147483648
  %v454 = vxor.u32 %v404, 2147483648
  %v455 = vxor.u32 %v409, 2147483648
  %v456 = vxor.u32 %v414, 2147483648
  %v457 = vxor.u32 %v419, 2147483648
  %v458 = vxor.u32 %v424, 2147483648
  %v459 = vxor.u32 %v429, 2147483648
  %v460 = vxor.u32 %v434, 2147483648
  %v461 = vxor.u32 %v439, 2147483648
  %v462 = vxor.u32 %v444, 2147483648
  %v463 = vxor.u32 %v449, 2147483648
  %v464 = vmul.f32 %v452, 1.442695
  %v465 = vpow.pop %v464
  %v466 = vmul.f32 %v453, 1.442695
  %v467 = vpow.pop %v466
  %v468 = vmul.f32 %v454, 1.442695
  %v469 = vpow.pop %v468
  %v470 = vmul.f32 %v455, 1.442695
  %v471 = vpow.pop %v470
  %v472 = vmul.f32 %v456, 1.442695
  %v473 = vpow.pop %v472
  %v474 = vmul.f32 %v457, 1.442695
  %v475 = vpow.pop %v474
  %v476 = vmul.f32 %v458, 1.442695
  %v477 = vpow.pop %v476
  %v478 = vmul.f32 %v459, 1.442695
  %v479 = vpow.pop %v478
  %v480 = vmul.f32 %v460, 1.442695
  %v481 = vpow.pop %v480
  %v482 = vmul.f32 %v461, 1.442695
  %v483 = vpow.pop %v482
  %v484 = vmul.f32 %v462, 1.442695
  %v485 = vpow.pop %v484
  %v486 = vmul.f32 %v463, 1.442695
  %v487 = vpow.pop %v486
  %v488 = vadd.f32 %v465, 1.0
  %v489 = vadd.f32 %v467, 1.0
  %v490 = vadd.f32 %v469, 1.0
  %v491 = vadd.f32 %v471, 1.0
  %v492 = vadd.f32 %v473, 1.0
  %v493 = vadd.f32 %v475, 1.0
  %v494 = vadd.f32 %v477, 1.0
  %v495 = vadd.f32 %v479, 1.0
  %v496 = vadd.f32 %v481, 1.0
  %v497 = vadd.f32 %v483, 1.0
  %v498 = vadd.f32 %v485, 1.0
  %v499 = vadd.f32 %v487, 1.0
  %v500 = vrcp.pop %v488
  %v501 = vmul.f32 1.0, %v500
  %v502 = vrcp.pop %v489
  %v503 = vmul.f32 1.0, %v502
  %v504 = vrcp.pop %v490
  %v505 = vmul.f32 1.0, %v504
  %v506 = vrcp.pop %v491
  %v507 = vmul.f32 1.0, %v506
  %v508 = vrcp.pop %v492
  %v509 = vmul.f32 1.0, %v508
  %v510 = vrcp.pop %v493
  %v511 = vmul.f32 1.0, %v510
  %v512 = vrcp.pop %v494
  %v513 = vmul.f32 1.0, %v512
  %v514 = vrcp.pop %v495
  %v515 = vmul.f32 1.0, %v514
  %v516 = vrcp.pop %v496
  %v517 = vmul.f32 1.0, %v516
  %v518 = vrcp.pop %v497
  %v519 = vmul.f32 1.0, %v518
  %v520 = vrcp.pop %v498
  %v521 = vmul.f32 1.0, %v520
  %v522 = vrcp.pop %v499
  %v523 = vmul.f32 1.0, %v522
  %v524 = vsub.f32 %v334, %v14
  %v525 = vsub.f32 %v339, %v15
  %v526 = vsub.f32 %v344, %v16
  %v527 = vsub.f32 %v349, %v17
  %v528 = vsub.f32 %v354, %v18
  %v529 = vsub.f32 %v359, %v19
  %v530 = vsub.f32 %v364, %v20
  %v531 = vsub.f32 %v369, %v21
  %v532 = vsub.f32 %v374, %v22
  %v533 = vsub.f32 %v379, %v23
  %v534 = vsub.f32 %v384, %v24
  %v535 = vsub.f32 %v389, %v25
  %v536 = vmul.f32 %v501, %v524
  %v537 = vmul.f32 %v503, %v525
  %v538 = vmul.f32 %v505, %v526
  %v539 = vmul.f32 %v507, %v527
  %v540 = vmul.f32 %v509, %v528
  %v541 = vmul.f32 %v511, %v529
  %v542 = vmul.f32 %v513, %v530
  %v543 = vmul.f32 %v515, %v531
  %v544 = vmul.f32 %v517, %v532
  %v545 = vmul.f32 %v519, %v533
  %v546 = vmul.f32 %v521, %v534
  %v547 = vmul.f32 %v523, %v535
  %v548 = vadd.f32 %v14, %v536
  %v549 = vadd.f32 %v15, %v537
  %v550 = vadd.f32 %v16, %v538
  %v551 = vadd.f32 %v17, %v539
  %v552 = vadd.f32 %v18, %v540
  %v553 = vadd.f32 %v19, %v541
  %v554 = vadd.f32 %v20, %v542
  %v555 = vadd.f32 %v21, %v543
  %v556 = vadd.f32 %v22, %v544
  %v557 = vadd.f32 %v23, %v545
  %v558 = vadd.f32 %v24, %v546
  %v559 = vadd.f32 %v25, %v547
  %s560 = scalar_lea.vmem %s0, 192
  %v561 = vld [vmem:[%s560] sm:$0xff]
  %v562 = vld [vmem:[%s560 + $0x8] sm:$0xff]
  %v563 = vld [vmem:[%s560 + $0x10] sm:$0xff]
  %v564 = vld [vmem:[%s560 + $0x18] sm:$0xff]
  %v565 = vld [vmem:[%s560 + $0x20] sm:$0xff]
  %v566 = vld [vmem:[%s560 + $0x28] sm:$0xff]
  %v567 = vld [vmem:[%s560 + $0x30] sm:$0xff]
  %v568 = vld [vmem:[%s560 + $0x38] sm:$0xff]
  %v569 = vld [vmem:[%s560 + $0x40] sm:$0xff]
  %v570 = vld [vmem:[%s560 + $0x48] sm:$0xff]
  %v571 = vld [vmem:[%s560 + $0x50] sm:$0xff]
  %v572 = vld [vmem:[%s560 + $0x58] sm:$0xff]
  %v573 = vld [vmem:[%s560 + $0x60] sm:$0xff]
  %v574 = vld [vmem:[%s560 + $0x68] sm:$0xff]
  %v575 = vld [vmem:[%s560 + $0x70] sm:$0xff]
  %v576 = vld [vmem:[%s560 + $0x78] sm:$0xff]
  %v577 = vld [vmem:[%s560 + $0x80] sm:$0xff]
  %v578 = vld [vmem:[%s560 + $0x88] sm:$0xff]
  %v579 = vld [vmem:[%s560 + $0x90] sm:$0xff]
  %v580 = vld [vmem:[%s560 + $0x98] sm:$0xff]
  %v581 = vld [vmem:[%s560 + $0xa0] sm:$0xff]
  %v582 = vld [vmem:[%s560 + $0xa8] sm:$0xff]
  %v583 = vld [vmem:[%s560 + $0xb0] sm:$0xff]
  %v584 = vld [vmem:[%s560 + $0xb8] sm:$0xff]
  %s585 = scalar_lea.vmem %s1, 192
  %v586 = vld [vmem:[%s585] sm:$0xff]
  %v587 = vld [vmem:[%s585 + $0x8] sm:$0xff]
  %v588 = vld [vmem:[%s585 + $0x10] sm:$0xff]
  %v589 = vld [vmem:[%s585 + $0x18] sm:$0xff]
  %v590 = vld [vmem:[%s585 + $0x20] sm:$0xff]
  %v591 = vld [vmem:[%s585 + $0x28] sm:$0xff]
  %v592 = vld [vmem:[%s585 + $0x30] sm:$0xff]
  %v593 = vld [vmem:[%s585 + $0x38] sm:$0xff]
  %v594 = vld [vmem:[%s585 + $0x40] sm:$0xff]
  %v595 = vld [vmem:[%s585 + $0x48] sm:$0xff]
  %v596 = vld [vmem:[%s585 + $0x50] sm:$0xff]
  %v597 = vld [vmem:[%s585 + $0x58] sm:$0xff]
  %v598 = vld [vmem:[%s585 + $0x60] sm:$0xff]
  %v599 = vld [vmem:[%s585 + $0x68] sm:$0xff]
  %v600 = vld [vmem:[%s585 + $0x70] sm:$0xff]
  %v601 = vld [vmem:[%s585 + $0x78] sm:$0xff]
  %v602 = vld [vmem:[%s585 + $0x80] sm:$0xff]
  %v603 = vld [vmem:[%s585 + $0x88] sm:$0xff]
  %v604 = vld [vmem:[%s585 + $0x90] sm:$0xff]
  %v605 = vld [vmem:[%s585 + $0x98] sm:$0xff]
  %v606 = vld [vmem:[%s585 + $0xa0] sm:$0xff]
  %v607 = vld [vmem:[%s585 + $0xa8] sm:$0xff]
  %v608 = vld [vmem:[%s585 + $0xb0] sm:$0xff]
  %v609 = vld [vmem:[%s585 + $0xb8] sm:$0xff]
  %611 = vset.pattern.permute.xlu0 0
  %612 = vperm.xlu0 %611, %v586
  %v613 = vpop.permute.xlu0 %612
  %616 = vset.pattern.permute.xlu0 0
  %617 = vperm.xlu0 %616, %v587
  %v618 = vpop.permute.xlu0 %617
  %621 = vset.pattern.permute.xlu0 0
  %622 = vperm.xlu0 %621, %v588
  %v623 = vpop.permute.xlu0 %622
  %626 = vset.pattern.permute.xlu0 0
  %627 = vperm.xlu0 %626, %v589
  %v628 = vpop.permute.xlu0 %627
  %631 = vset.pattern.permute.xlu0 0
  %632 = vperm.xlu0 %631, %v590
  %v633 = vpop.permute.xlu0 %632
  %636 = vset.pattern.permute.xlu0 0
  %637 = vperm.xlu0 %636, %v591
  %v638 = vpop.permute.xlu0 %637
  %641 = vset.pattern.permute.xlu0 0
  %642 = vperm.xlu0 %641, %v592
  %v643 = vpop.permute.xlu0 %642
  %646 = vset.pattern.permute.xlu0 0
  %647 = vperm.xlu0 %646, %v593
  %v648 = vpop.permute.xlu0 %647
  %651 = vset.pattern.permute.xlu0 0
  %652 = vperm.xlu0 %651, %v594
  %v653 = vpop.permute.xlu0 %652
  %656 = vset.pattern.permute.xlu0 0
  %657 = vperm.xlu0 %656, %v595
  %v658 = vpop.permute.xlu0 %657
  %661 = vset.pattern.permute.xlu0 0
  %662 = vperm.xlu0 %661, %v596
  %v663 = vpop.permute.xlu0 %662
  %666 = vset.pattern.permute.xlu0 0
  %667 = vperm.xlu0 %666, %v597
  %v668 = vpop.permute.xlu0 %667
  %671 = vset.pattern.permute.xlu0 0
  %672 = vperm.xlu0 %671, %v598
  %v673 = vpop.permute.xlu0 %672
  %676 = vset.pattern.permute.xlu0 0
  %677 = vperm.xlu0 %676, %v599
  %v678 = vpop.permute.xlu0 %677
  %681 = vset.pattern.permute.xlu0 0
  %682 = vperm.xlu0 %681, %v600
  %v683 = vpop.permute.xlu0 %682
  %686 = vset.pattern.permute.xlu0 0
  %687 = vperm.xlu0 %686, %v601
  %v688 = vpop.permute.xlu0 %687
  %691 = vset.pattern.permute.xlu0 0
  %692 = vperm.xlu0 %691, %v602
  %v693 = vpop.permute.xlu0 %692
  %696 = vset.pattern.permute.xlu0 0
  %697 = vperm.xlu0 %696, %v603
  %v698 = vpop.permute.xlu0 %697
  %701 = vset.pattern.permute.xlu0 0
  %702 = vperm.xlu0 %701, %v604
  %v703 = vpop.permute.xlu0 %702
  %706 = vset.pattern.permute.xlu0 0
  %707 = vperm.xlu0 %706, %v605
  %v708 = vpop.permute.xlu0 %707
  %711 = vset.pattern.permute.xlu0 0
  %712 = vperm.xlu0 %711, %v606
  %v713 = vpop.permute.xlu0 %712
  %716 = vset.pattern.permute.xlu0 0
  %717 = vperm.xlu0 %716, %v607
  %v718 = vpop.permute.xlu0 %717
  %721 = vset.pattern.permute.xlu0 0
  %722 = vperm.xlu0 %721, %v608
  %v723 = vpop.permute.xlu0 %722
  %726 = vset.pattern.permute.xlu0 0
  %727 = vperm.xlu0 %726, %v609
  %v728 = vpop.permute.xlu0 %727
  %v731 = vsel %vm194, %v561, 0
  %v734 = vsel %vm194, %v562, 0
  %v737 = vsel %vm194, %v563, 0
  %v740 = vsel %vm194, %v564, 0
  %v743 = vsel %vm194, %v565, 0
  %v746 = vsel %vm194, %v566, 0
  %v749 = vsel %vm194, %v567, 0
  %v752 = vsel %vm194, %v568, 0
  %v755 = vsel %vm194, %v569, 0
  %v758 = vsel %vm194, %v570, 0
  %v761 = vsel %vm194, %v571, 0
  %v764 = vsel %vm194, %v572, 0
  %v767 = vsel %vm194, %v573, 0
  %v770 = vsel %vm194, %v574, 0
  %v773 = vsel %vm194, %v575, 0
  %v776 = vsel %vm194, %v576, 0
  %v779 = vsel %vm194, %v577, 0
  %v782 = vsel %vm194, %v578, 0
  %v785 = vsel %vm194, %v579, 0
  %v788 = vsel %vm194, %v580, 0
  %v791 = vsel %vm194, %v581, 0
  %v794 = vsel %vm194, %v582, 0
  %v797 = vsel %vm194, %v583, 0
  %v800 = vsel %vm194, %v584, 0
  %802 = vmatprep.subr.mxu0 0.0
  %803 = vmatpush1.msra.mxu0 %v548
  %804 = vmatprep.subr.mxu0 0.0
  %805 = vmatpush1.msra.mxu0 %v549
  %806 = vmatprep.subr.mxu0 0.0
  %807 = vmatpush1.msra.mxu0 %v550
  %808 = vmatprep.subr.mxu0 0.0
  %809 = vmatpush1.msra.mxu0 %v551
  %810 = vmatprep.subr.mxu0 0.0
  %811 = vmatpush1.msra.mxu0 %v552
  %812 = vmatprep.subr.mxu0 0.0
  %813 = vmatpush1.msra.mxu0 %v553
  %814 = vmatprep.subr.mxu0 0.0
  %815 = vmatpush1.msra.mxu0 %v554
  %816 = vmatprep.subr.mxu0 0.0
  %817 = vmatpush1.msra.mxu0 %v555
  %818 = vmatprep.subr.mxu0 0.0
  %819 = vmatpush1.msra.mxu0 %v556
  %820 = vmatprep.subr.mxu0 0.0
  %821 = vmatpush1.msra.mxu0 %v557
  %822 = vmatprep.subr.mxu0 0.0
  %823 = vmatpush1.msra.mxu0 %v558
  %824 = vmatprep.subr.mxu0 0.0
  %825 = vmatpush1.msra.mxu0 %v559
  %826 = vmatprep.subr.mxu0 0.0
  %827 = vmatpush1.msra.mxu0 0.0
  %828 = vmatprep.subr.mxu0 0.0
  %829 = vmatpush1.msra.mxu0 0.0
  %830 = vmatprep.subr.mxu0 0.0
  %831 = vmatpush1.msra.mxu0 0.0
  %832 = vmatprep.subr.mxu0 0.0
  %833 = vmatpush1.msra.mxu0 0.0
  %834 = vmatprep.subr.mxu0 0.0
  %835 = vmatpush1.msra.mxu0 0.0
  %836 = vmatprep.subr.mxu0 0.0
  %837 = vmatpush1.msra.mxu0 0.0
  %838 = vmatprep.subr.mxu0 0.0
  %839 = vmatpush1.msra.mxu0 0.0
  %840 = vmatprep.subr.mxu0 0.0
  %841 = vmatpush1.msra.mxu0 0.0
  %842 = vmatprep.subr.mxu0 0.0
  %843 = vmatpush1.msra.mxu0 0.0
  %844 = vmatprep.subr.mxu0 0.0
  %845 = vmatpush1.msra.mxu0 0.0
  %846 = vmatprep.subr.mxu0 0.0
  %847 = vmatpush1.msra.mxu0 0.0
  %848 = vmatprep.subr.mxu0 0.0
  %849 = vmatpush1.msra.mxu0 0.0
  %850 = vmatprep.subr.mxu0 0.0
  %851 = vmatpush1.msra.mxu0 0.0
  %852 = vmatprep.subr.mxu0 0.0
  %853 = vmatpush1.msra.mxu0 0.0
  %854 = vmatprep.subr.mxu0 0.0
  %855 = vmatpush1.msra.mxu0 0.0
  %856 = vmatprep.subr.mxu0 0.0
  %857 = vmatpush1.msra.mxu0 0.0
  %858 = vmatprep.subr.mxu0 0.0
  %859 = vmatpush1.msra.mxu0 0.0
  %860 = vmatprep.subr.mxu0 0.0
  %861 = vmatpush1.msra.mxu0 0.0
  %862 = vmatprep.subr.mxu0 0.0
  %863 = vmatpush1.msra.mxu0 0.0
  %864 = vmatprep.subr.mxu0 0.0
  %865 = vmatpush1.msra.mxu0 0.0
  %866 = vmatprep.mubr.f32.mxu0 0.0
  %867 = vmatmul.mubr.f32.gmra.mrb[0].mxu0 %v731
  %v868 = vpop.f32.mrb[0].mxu0
  %v869 = vadd.f32 %v613, %v868
  %v870 = vpop.f32.mrb[0].mxu0
  %871 = vmatprep.mubr.f32.mxu0 0.0
  %872 = vmatmul.mubr.f32.gmra.mrb[0].mxu0 %v734
  %v873 = vpop.f32.mrb[0].mxu0
  %v874 = vadd.f32 %v618, %v873
  %v875 = vpop.f32.mrb[0].mxu0
  %876 = vmatprep.mubr.f32.mxu0 0.0
  %877 = vmatmul.mubr.f32.gmra.mrb[0].mxu0 %v737
  %v878 = vpop.f32.mrb[0].mxu0
  %v879 = vadd.f32 %v623, %v878
  %v880 = vpop.f32.mrb[0].mxu0
  %881 = vmatprep.mubr.f32.mxu0 0.0
  %882 = vmatmul.mubr.f32.gmra.mrb[0].mxu0 %v740
  %v883 = vpop.f32.mrb[0].mxu0
  %v884 = vadd.f32 %v628, %v883
  %v885 = vpop.f32.mrb[0].mxu0
  %886 = vmatprep.mubr.f32.mxu0 0.0
  %887 = vmatmul.mubr.f32.gmra.mrb[0].mxu0 %v743
  %v888 = vpop.f32.mrb[0].mxu0
  %v889 = vadd.f32 %v633, %v888
  %v890 = vpop.f32.mrb[0].mxu0
  %891 = vmatprep.mubr.f32.mxu0 0.0
  %892 = vmatmul.mubr.f32.gmra.mrb[0].mxu0 %v746
  %v893 = vpop.f32.mrb[0].mxu0
  %v894 = vadd.f32 %v638, %v893
  %v895 = vpop.f32.mrb[0].mxu0
  %896 = vmatprep.mubr.f32.mxu0 0.0
  %897 = vmatmul.mubr.f32.gmra.mrb[0].mxu0 %v749
  %v898 = vpop.f32.mrb[0].mxu0
  %v899 = vadd.f32 %v643, %v898
  %v900 = vpop.f32.mrb[0].mxu0
  %901 = vmatprep.mubr.f32.mxu0 0.0
  %902 = vmatmul.mubr.f32.gmra.mrb[0].mxu0 %v752
  %v903 = vpop.f32.mrb[0].mxu0
  %v904 = vadd.f32 %v648, %v903
  %v905 = vpop.f32.mrb[0].mxu0
  %906 = vmatprep.mubr.f32.mxu0 0.0
  %907 = vmatmul.mubr.f32.gmra.mrb[0].mxu0 %v755
  %v908 = vpop.f32.mrb[0].mxu0
  %v909 = vadd.f32 %v653, %v908
  %v910 = vpop.f32.mrb[0].mxu0
  %911 = vmatprep.mubr.f32.mxu0 0.0
  %912 = vmatmul.mubr.f32.gmra.mrb[0].mxu0 %v758
  %v913 = vpop.f32.mrb[0].mxu0
  %v914 = vadd.f32 %v658, %v913
  %v915 = vpop.f32.mrb[0].mxu0
  %916 = vmatprep.mubr.f32.mxu0 0.0
  %917 = vmatmul.mubr.f32.gmra.mrb[0].mxu0 %v761
  %v918 = vpop.f32.mrb[0].mxu0
  %v919 = vadd.f32 %v663, %v918
  %v920 = vpop.f32.mrb[0].mxu0
  %921 = vmatprep.mubr.f32.mxu0 0.0
  %922 = vmatmul.mubr.f32.gmra.mrb[0].mxu0 %v764
  %v923 = vpop.f32.mrb[0].mxu0
  %v924 = vadd.f32 %v668, %v923
  %v925 = vpop.f32.mrb[0].mxu0
  %926 = vmatprep.mubr.f32.mxu0 0.0
  %927 = vmatmul.mubr.f32.gmra.mrb[0].mxu0 %v767
  %v928 = vpop.f32.mrb[0].mxu0
  %v929 = vadd.f32 %v673, %v928
  %v930 = vpop.f32.mrb[0].mxu0
  %931 = vmatprep.mubr.f32.mxu0 0.0
  %932 = vmatmul.mubr.f32.gmra.mrb[0].mxu0 %v770
  %v933 = vpop.f32.mrb[0].mxu0
  %v934 = vadd.f32 %v678, %v933
  %v935 = vpop.f32.mrb[0].mxu0
  %936 = vmatprep.mubr.f32.mxu0 0.0
  %937 = vmatmul.mubr.f32.gmra.mrb[0].mxu0 %v773
  %v938 = vpop.f32.mrb[0].mxu0
  %v939 = vadd.f32 %v683, %v938
  %v940 = vpop.f32.mrb[0].mxu0
  %941 = vmatprep.mubr.f32.mxu0 0.0
  %942 = vmatmul.mubr.f32.gmra.mrb[0].mxu0 %v776
  %v943 = vpop.f32.mrb[0].mxu0
  %v944 = vadd.f32 %v688, %v943
  %v945 = vpop.f32.mrb[0].mxu0
  %946 = vmatprep.mubr.f32.mxu0 0.0
  %947 = vmatmul.mubr.f32.gmra.mrb[0].mxu0 %v779
  %v948 = vpop.f32.mrb[0].mxu0
  %v949 = vadd.f32 %v693, %v948
  %v950 = vpop.f32.mrb[0].mxu0
  %951 = vmatprep.mubr.f32.mxu0 0.0
  %952 = vmatmul.mubr.f32.gmra.mrb[0].mxu0 %v782
  %v953 = vpop.f32.mrb[0].mxu0
  %v954 = vadd.f32 %v698, %v953
  %v955 = vpop.f32.mrb[0].mxu0
  %956 = vmatprep.mubr.f32.mxu0 0.0
  %957 = vmatmul.mubr.f32.gmra.mrb[0].mxu0 %v785
  %v958 = vpop.f32.mrb[0].mxu0
  %v959 = vadd.f32 %v703, %v958
  %v960 = vpop.f32.mrb[0].mxu0
  %961 = vmatprep.mubr.f32.mxu0 0.0
  %962 = vmatmul.mubr.f32.gmra.mrb[0].mxu0 %v788
  %v963 = vpop.f32.mrb[0].mxu0
  %v964 = vadd.f32 %v708, %v963
  %v965 = vpop.f32.mrb[0].mxu0
  %966 = vmatprep.mubr.f32.mxu0 0.0
  %967 = vmatmul.mubr.f32.gmra.mrb[0].mxu0 %v791
  %v968 = vpop.f32.mrb[0].mxu0
  %v969 = vadd.f32 %v713, %v968
  %v970 = vpop.f32.mrb[0].mxu0
  %971 = vmatprep.mubr.f32.mxu0 0.0
  %972 = vmatmul.mubr.f32.gmra.mrb[0].mxu0 %v794
  %v973 = vpop.f32.mrb[0].mxu0
  %v974 = vadd.f32 %v718, %v973
  %v975 = vpop.f32.mrb[0].mxu0
  %976 = vmatprep.mubr.f32.mxu0 0.0
  %977 = vmatmul.mubr.f32.gmra.mrb[0].mxu0 %v797
  %v978 = vpop.f32.mrb[0].mxu0
  %v979 = vadd.f32 %v723, %v978
  %v980 = vpop.f32.mrb[0].mxu0
  %981 = vmatprep.mubr.f32.mxu0 0.0
  %982 = vmatmul.mubr.f32.gmra.mrb[0].mxu0 %v800
  %v983 = vpop.f32.mrb[0].mxu0
  %v984 = vadd.f32 %v728, %v983
  %v985 = vpop.f32.mrb[0].mxu0
  %986 = vdwg.mxu0
  %v987 = vxor.u32 %v929, 2147483648
  %v988 = vxor.u32 %v934, 2147483648
  %v989 = vxor.u32 %v939, 2147483648
  %v990 = vxor.u32 %v944, 2147483648
  %v991 = vxor.u32 %v949, 2147483648
  %v992 = vxor.u32 %v954, 2147483648
  %v993 = vxor.u32 %v959, 2147483648
  %v994 = vxor.u32 %v964, 2147483648
  %v995 = vxor.u32 %v969, 2147483648
  %v996 = vxor.u32 %v974, 2147483648
  %v997 = vxor.u32 %v979, 2147483648
  %v998 = vxor.u32 %v984, 2147483648
  %v999 = vmul.f32 %v987, 1.442695
  %v1000 = vpow.pop %v999
  %v1001 = vmul.f32 %v988, 1.442695
  %v1002 = vpow.pop %v1001
  %v1003 = vmul.f32 %v989, 1.442695
  %v1004 = vpow.pop %v1003
  %v1005 = vmul.f32 %v990, 1.442695
  %v1006 = vpow.pop %v1005
  %v1007 = vmul.f32 %v991, 1.442695
  %v1008 = vpow.pop %v1007
  %v1009 = vmul.f32 %v992, 1.442695
  %v1010 = vpow.pop %v1009
  %v1011 = vmul.f32 %v993, 1.442695
  %v1012 = vpow.pop %v1011
  %v1013 = vmul.f32 %v994, 1.442695
  %v1014 = vpow.pop %v1013
  %v1015 = vmul.f32 %v995, 1.442695
  %v1016 = vpow.pop %v1015
  %v1017 = vmul.f32 %v996, 1.442695
  %v1018 = vpow.pop %v1017
  %v1019 = vmul.f32 %v997, 1.442695
  %v1020 = vpow.pop %v1019
  %v1021 = vmul.f32 %v998, 1.442695
  %v1022 = vpow.pop %v1021
  %v1023 = vadd.f32 %v1000, 1.0
  %v1024 = vadd.f32 %v1002, 1.0
  %v1025 = vadd.f32 %v1004, 1.0
  %v1026 = vadd.f32 %v1006, 1.0
  %v1027 = vadd.f32 %v1008, 1.0
  %v1028 = vadd.f32 %v1010, 1.0
  %v1029 = vadd.f32 %v1012, 1.0
  %v1030 = vadd.f32 %v1014, 1.0
  %v1031 = vadd.f32 %v1016, 1.0
  %v1032 = vadd.f32 %v1018, 1.0
  %v1033 = vadd.f32 %v1020, 1.0
  %v1034 = vadd.f32 %v1022, 1.0
  %v1035 = vrcp.pop %v1023
  %v1036 = vmul.f32 1.0, %v1035
  %v1037 = vrcp.pop %v1024
  %v1038 = vmul.f32 1.0, %v1037
  %v1039 = vrcp.pop %v1025
  %v1040 = vmul.f32 1.0, %v1039
  %v1041 = vrcp.pop %v1026
  %v1042 = vmul.f32 1.0, %v1041
  %v1043 = vrcp.pop %v1027
  %v1044 = vmul.f32 1.0, %v1043
  %v1045 = vrcp.pop %v1028
  %v1046 = vmul.f32 1.0, %v1045
  %v1047 = vrcp.pop %v1029
  %v1048 = vmul.f32 1.0, %v1047
  %v1049 = vrcp.pop %v1030
  %v1050 = vmul.f32 1.0, %v1049
  %v1051 = vrcp.pop %v1031
  %v1052 = vmul.f32 1.0, %v1051
  %v1053 = vrcp.pop %v1032
  %v1054 = vmul.f32 1.0, %v1053
  %v1055 = vrcp.pop %v1033
  %v1056 = vmul.f32 1.0, %v1055
  %v1057 = vrcp.pop %v1034
  %v1058 = vmul.f32 1.0, %v1057
  %v1059 = vsub.f32 %v869, %v548
  %v1060 = vsub.f32 %v874, %v549
  %v1061 = vsub.f32 %v879, %v550
  %v1062 = vsub.f32 %v884, %v551
  %v1063 = vsub.f32 %v889, %v552
  %v1064 = vsub.f32 %v894, %v553
  %v1065 = vsub.f32 %v899, %v554
  %v1066 = vsub.f32 %v904, %v555
  %v1067 = vsub.f32 %v909, %v556
  %v1068 = vsub.f32 %v914, %v557
  %v1069 = vsub.f32 %v919, %v558
  %v1070 = vsub.f32 %v924, %v559
  %v1071 = vmul.f32 %v1036, %v1059
  %v1072 = vmul.f32 %v1038, %v1060
  %v1073 = vmul.f32 %v1040, %v1061
  %v1074 = vmul.f32 %v1042, %v1062
  %v1075 = vmul.f32 %v1044, %v1063
  %v1076 = vmul.f32 %v1046, %v1064
  %v1077 = vmul.f32 %v1048, %v1065
  %v1078 = vmul.f32 %v1050, %v1066
  %v1079 = vmul.f32 %v1052, %v1067
  %v1080 = vmul.f32 %v1054, %v1068
  %v1081 = vmul.f32 %v1056, %v1069
  %v1082 = vmul.f32 %v1058, %v1070
  %v1083 = vadd.f32 %v548, %v1071
  %v1084 = vadd.f32 %v549, %v1072
  %v1085 = vadd.f32 %v550, %v1073
  %v1086 = vadd.f32 %v551, %v1074
  %v1087 = vadd.f32 %v552, %v1075
  %v1088 = vadd.f32 %v553, %v1076
  %v1089 = vadd.f32 %v554, %v1077
  %v1090 = vadd.f32 %v555, %v1078
  %v1091 = vadd.f32 %v556, %v1079
  %v1092 = vadd.f32 %v557, %v1080
  %v1093 = vadd.f32 %v558, %v1081
  %v1094 = vadd.f32 %v559, %v1082
  %vm1095 = vcmask 261120
  %1096 = vst.msk [vmem:[%s3] sm:$0xff] %vm1095, %v1083
  %1097 = vst.msk [vmem:[%s3 + $0x8] sm:$0xff] %vm1095, %v1084
  %1098 = vst.msk [vmem:[%s3 + $0x10] sm:$0xff] %vm1095, %v1085
  %1099 = vst.msk [vmem:[%s3 + $0x18] sm:$0xff] %vm1095, %v1086
  %1100 = vst.msk [vmem:[%s3 + $0x20] sm:$0xff] %vm1095, %v1087
  %1101 = vst.msk [vmem:[%s3 + $0x28] sm:$0xff] %vm1095, %v1088
  %1102 = vst.msk [vmem:[%s3 + $0x30] sm:$0xff] %vm1095, %v1089
  %1103 = vst.msk [vmem:[%s3 + $0x38] sm:$0xff] %vm1095, %v1090
  %1104 = vst.msk [vmem:[%s3 + $0x40] sm:$0xff] %vm1095, %v1091
  %1105 = vst.msk [vmem:[%s3 + $0x48] sm:$0xff] %vm1095, %v1092
  %1106 = vst.msk [vmem:[%s3 + $0x50] sm:$0xff] %vm1095, %v1093
  %1107 = vst.msk [vmem:[%s3 + $0x58] sm:$0xff] %vm1095, %v1094
  // Predicated region
  $region14: #{tpu_custom_call.1} parent=0 // pred_check
    _
  $region15: #{tpu_custom_call.1} parent=0 // pred_check_branch
    %1109 = sbr.rel (0) target = $region17
  $region16: #{tpu_custom_call.1} parent=0 // pred_region
    _
  $region17: #{tpu_custom_call.1} parent=0 // pred_fallthru
    _
  // Predicated region
  $region18: #{tpu_custom_call.1} parent=0 // pred_check
    _
  $region19: #{tpu_custom_call.1} parent=0 // pred_check_branch
    %1111 = sbr.rel (0) target = $region21
  $region20: #{tpu_custom_call.1} parent=0 // pred_region
    _
  $region21: #{tpu_custom_call.1} parent=0 // pred_fallthru
    _

</llo_original>
